<compile_context>
chip_gen: v7x
topology: tpu7x:2x2x1
jax: 0.10.0
libtpu: 0.0.40
codegen_flags: <defaults>
</compile_context>

<pallas_src>
import functools

import jax
import jax.numpy as jnp
from jax import lax
from jax.experimental import pallas as pl
from jax.experimental.pallas import tpu as pltpu


def _jacobi_norm_reg_kernel(x_ref, wt_ref, b_ref, o_ref, y_acc, cn_acc,
                            *, num_proj: int):
    """Grid = (batch blocks, D blocks).  D is the reduction axis."""
    k = pl.program_id(1)
    nk = pl.num_programs(1)

    @pl.when(k == 0)
    def _init():
        y_acc[...] = jnp.zeros_like(y_acc)
        cn_acc[...] = jnp.zeros_like(cn_acc)

    x = x_ref[...]                      # (TB, TD)  compute dtype
    wt = wt_ref[...]                    # (C,  TD)  compute dtype

    # Forward logits accumulation: y += x @ W   (W stored as (C, D); contract D)
    y_acc[...] += lax.dot_general(
        x, wt, (((1,), (1,)), ((), ())),
        preferred_element_type=jnp.float32)

    # Column-norm^2 accumulation in f32:  cn[0, c] += sum_d W[c, d]^2.
    # Done as a (1, TD) x (C, TD)^T matmul so the result lands directly in a
    # lane-major (1, C) row (no sublane->lane relayout).
    wt32 = wt.astype(jnp.float32)
    td = wt.shape[1]
    cn_acc[...] += lax.dot_general(
        jnp.ones((1, td), jnp.float32), wt32 * wt32,
        (((1,), (1,)), ((), ())),
        preferred_element_type=jnp.float32)

    @pl.when(k == nk - 1)
    def _finalize():
        y = y_acc[...] + b_ref[...].astype(jnp.float32)     # (TB, C) logits
        cn = cn_acc[...]                                    # (1, C) colnorm^2
        tb, c = y.shape

        col_ids = lax.broadcasted_iota(jnp.int32, (tb, c), 1)
        proj_ids = lax.broadcasted_iota(jnp.int32, (1, num_proj), 1)
        selected = jnp.zeros((tb, c), dtype=jnp.bool_)
        out_row = jnp.zeros((1, num_proj), jnp.float32)
        neg_inf = jnp.float32(-jnp.inf)

        # num_proj is small and static -> unrolled.
        for ii in range(num_proj):
            # ii-th largest logit per row == argmax over not-yet-selected cols
            # (min-index tie break matches stable descending argsort).
            masked = jnp.where(selected, neg_inf, y)
            row_max = jnp.max(masked, axis=1, keepdims=True)
            is_max = masked == row_max
            cand = jnp.where(is_max, col_ids, jnp.int32(c))
            idx = jnp.min(cand, axis=1, keepdims=True)      # (TB, 1)
            onehot = col_ids == idx                         # (TB, C)
            selected = jnp.logical_or(selected, onehot)

            # ||Jv||_F^2 contribution of this batch block:
            #   sum_b ||W[:, idx_b]||^2 = sum_{b,c} onehot * colnorm2
            ss_rows = jnp.sum(jnp.where(onehot, cn, 0.0),
                              axis=1, keepdims=True)        # (TB, 1)
            ss_11 = jnp.sum(ss_rows, axis=0, keepdims=True)  # (1, 1)
            out_row = out_row + jnp.where(proj_ids == ii, ss_11, 0.0)

        o_ref[0] = out_row                                  # (1, num_proj)


def jacobi_norm_reg(x_nchw, w, b, *, n=2, block_b=None, block_d=None,
                    compute_dtype=jnp.float32):
    """Pallas implementation of JacobiNormReg(n=n, p='fro') with f = linear."""
    B = x_nchw.shape[0]
    x_flat = x_nchw.reshape(B, -1)
    D = x_flat.shape[1]
    C = w.shape[1]
    num_proj = C if n == -1 else int(n)
    assert 0 < num_proj <= C, "n must be -1 or in [1, C]"

    # Keep the large D axis on lanes everywhere: W transposed to (C, D).
    w_t = jnp.asarray(w, jnp.float32).T.astype(compute_dtype)    # (C, D)
    bias = jnp.asarray(b, jnp.float32).reshape(1, C)
    x_flat = x_flat.astype(compute_dtype)

    # ---- D tiling (reduction axis).  Zero-padding D changes neither the
    # logits nor the column norms. ------------------------------------------
    if block_d is None:
        block_d = 512
    block_d = min(block_d, pl.cdiv(D, 128) * 128)
    assert block_d % 128 == 0
    d_padded = pl.cdiv(D, block_d) * block_d
    if d_padded != D:
        x_flat = jnp.pad(x_flat, ((0, 0), (0, d_padded - D)))
        w_t = jnp.pad(w_t, ((0, 0), (0, d_padded - D)))

    # ---- B tiling (parallel axis). -----------------------------------------
    if block_b is None:
        block_b = min(B, 256)
    if B % block_b != 0 or (block_b % 8 != 0 and block_b != B):
        block_b = B          # fall back: whole batch as a single block

    nb = B // block_b
    nk = d_padded // block_d

    kernel = functools.partial(_jacobi_norm_reg_kernel, num_proj=num_proj)
    partials = pl.pallas_call(
        kernel,
        out_shape=jax.ShapeDtypeStruct((nb, 1, num_proj), jnp.float32),
        grid_spec=pltpu.PrefetchScalarGridSpec(
            num_scalar_prefetch=0,
            grid=(nb, nk),
            in_specs=[
                pl.BlockSpec((block_b, block_d), lambda bb, kk: (bb, kk)),  # x
                pl.BlockSpec((C, block_d), lambda bb, kk: (0, kk)),         # W^T
                pl.BlockSpec((1, C), lambda bb, kk: (0, 0)),                # bias
            ],
            out_specs=pl.BlockSpec((1, 1, num_proj),
                                   lambda bb, kk: (bb, 0, 0)),
            scratch_shapes=[
                pltpu.VMEM((block_b, C), jnp.float32),   # logits accumulator
                pltpu.VMEM((1, C), jnp.float32),         # colnorm^2 accumulator
            ],
        ),
        compiler_params=pltpu.CompilerParams(
            dimension_semantics=("parallel", "arbitrary")),
    )(x_flat, w_t, bias)

    # Tiny epilogue: combine per-batch-block partial sums of squares.
    ss = jnp.sum(partials, axis=(0, 1))                  # (num_proj,)
    inv_denom = jnp.float32(1.0 / (num_proj * B))        # hoisted reciprocal
    return jnp.sum(jnp.sqrt(ss)) * inv_denom


def jacobi_norm_reg_reference(x_nchw, w, b, *, n=2):
    """Pure-JAX reference using an actual VJP (mirrors torch.autograd.grad)."""
    B = x_nchw.shape[0]
    x_flat = x_nchw.reshape(B, -1).astype(jnp.float32)
    C = w.shape[1]
    num_proj = C if n == -1 else n

    f = lambda xx: xx @ w + b[0]
    y, vjp_fn = jax.vjp(f, x_flat)
    order = jnp.argsort(-y, axis=1)                     # stable descending
    j2 = jnp.float32(0.0)
    for ii in range(num_proj):
        v = jax.nn.one_hot(order[:, ii], C, dtype=jnp.float32)
        (jv,) = vjp_fn(v)
        j2 = j2 + jnp.linalg.norm(jv) / (num_proj * B)
    return j2


if __name__ == "__main__":
    key = jax.random.PRNGKey(0)
    kx, kw, kb = jax.random.split(key, 3)

    # x in NCHW; synthetic linear head f: R^{1024} -> R^{10}.
    B, C_in, H, W_sp = 16, 4, 16, 16
    D = C_in * H * W_sp
    C_out = 10

    x = jax.random.normal(kx, (B, C_in, H, W_sp), dtype=jnp.float32)
    w = jax.random.normal(kw, (D, C_out), dtype=jnp.float32) * 0.05
    b = jax.random.normal(kb, (1, C_out), dtype=jnp.float32) * 0.1

    # f32 path (exact tie-break parity with the reference); grid = (2, 2).
    out = jax.block_until_ready(
        jacobi_norm_reg(x, w, b, n=2, block_b=8, block_d=512))
    ref = jax.block_until_ready(jacobi_norm_reg_reference(x, w, b, n=2))
    assert jnp.allclose(out, ref, rtol=1e-3, atol=1e-3), (out, ref)

    # bf16 input path: halves HBM traffic of the (memory-bound) forward
    # matmul; selection / column-norm math stays in f32 (loose tolerance only
    # because bf16 logits can flip near-ties vs the f32 reference).
    out_bf16 = jax.block_until_ready(
        jacobi_norm_reg(x, w, b, n=2, block_b=8, block_d=256,
                        compute_dtype=jnp.bfloat16))
    assert jnp.allclose(out_bf16, ref, rtol=5e-2, atol=5e-2), (out_bf16, ref)

    print("KERNEL_OK")
</pallas_src>

<mosaic_0001>
module attributes {stable_mosaic.version = 11 : i64} {
  func.func @_jacobi_norm_reg_kernel(%arg0: i32, %arg1: i32, %arg2: memref<8x512xf32, #tpu.memory_space<vmem>>, %arg3: memref<10x512xf32, #tpu.memory_space<vmem>>, %arg4: memref<1x10xf32, #tpu.memory_space<vmem>>, %arg5: memref<1x1x2xf32, #tpu.memory_space<vmem>>, %arg6: memref<8x10xf32, #tpu.memory_space<vmem>>, %arg7: memref<1x10xf32, #tpu.memory_space<vmem>>) attributes {dimension_semantics = [#tpu.dimension_semantics<parallel>, #tpu.dimension_semantics<arbitrary>], iteration_bounds = array<i64: 2, 2>, scalar_prefetch = 0 : i64, scratch_operands = 2 : i64, tpu.core_type = #tpu.core_type<tc>, window_params = [{transform_indices = @transform_0, window_bounds = array<i64: 8, 512>}, {transform_indices = @transform_1, window_bounds = array<i64: 10, 512>}, {pipeline_mode = #tpu.pipeline_mode<synchronous>, transform_indices = @transform_2, window_bounds = array<i64: 1, 10>}, {transform_indices = @transform_3, window_bounds = array<i64: 1, 1, 2>}]} {
    %c0_i32 = arith.constant 0 : i32
    %0 = arith.cmpi eq, %arg1, %c0_i32 : i32
    %1 = arith.extui %0 : i1 to i32
    %c0_i32_0 = arith.constant 0 : i32
    %2 = arith.cmpi ne, %1, %c0_i32_0 : i32
    scf.if %2 {
      %cst_15 = arith.constant 0.000000e+00 : f32
      %18 = vector.broadcast %cst_15 : f32 to vector<8x10xf32>
      %c0_16 = arith.constant 0 : index
      %c0_17 = arith.constant 0 : index
      %19 = vector.load %arg6[%c0_16, %c0_17] : memref<8x10xf32, #tpu.memory_space<vmem>>, vector<8x10xf32>
      tpu.vector_store %arg6[%c0_16, %c0_17], %18 {strides = array<i32>} : memref<8x10xf32, #tpu.memory_space<vmem>>, vector<8x10xf32>,
      %cst_18 = arith.constant 0.000000e+00 : f32
      %20 = vector.broadcast %cst_18 : f32 to vector<1x10xf32>
      %c0_19 = arith.constant 0 : index
      %c0_20 = arith.constant 0 : index
      %21 = vector.load %arg7[%c0_19, %c0_20] : memref<1x10xf32, #tpu.memory_space<vmem>>, vector<1x10xf32>
      tpu.vector_store %arg7[%c0_19, %c0_20], %20 {strides = array<i32>} : memref<1x10xf32, #tpu.memory_space<vmem>>, vector<1x10xf32>,
    } else {
    }
    %c0 = arith.constant 0 : index
    %c0_1 = arith.constant 0 : index
    %3 = vector.load %arg2[%c0, %c0_1] : memref<8x512xf32, #tpu.memory_space<vmem>>, vector<8x512xf32>
    %c0_2 = arith.constant 0 : index
    %c0_3 = arith.constant 0 : index
    %4 = vector.load %arg3[%c0_2, %c0_3] : memref<10x512xf32, #tpu.memory_space<vmem>>, vector<10x512xf32>
    %c0_4 = arith.constant 0 : index
    %c0_5 = arith.constant 0 : index
    %5 = vector.load %arg6[%c0_4, %c0_5] : memref<8x10xf32, #tpu.memory_space<vmem>>, vector<8x10xf32>
    %cst = arith.constant dense<0.000000e+00> : vector<8x10xf32>
    %6 = tpu.matmul %3, %4, %cst {dimension_numbers = #tpu.dot_dimension_numbers<[1], [1], [0], [0], [0, 0, 1, 0], [], []>} : vector<8x512xf32>, vector<10x512xf32>, vector<8x10xf32> -> vector<8x10xf32>
    %7 = arith.addf %5, %6 : vector<8x10xf32>
    %c0_6 = arith.constant 0 : index
    %c0_7 = arith.constant 0 : index
    %8 = vector.load %arg6[%c0_6, %c0_7] : memref<8x10xf32, #tpu.memory_space<vmem>>, vector<8x10xf32>
    tpu.vector_store %arg6[%c0_6, %c0_7], %7 {strides = array<i32>} : memref<8x10xf32, #tpu.memory_space<vmem>>, vector<8x10xf32>,
    %c0_8 = arith.constant 0 : index
    %c0_9 = arith.constant 0 : index
    %9 = vector.load %arg7[%c0_8, %c0_9] : memref<1x10xf32, #tpu.memory_space<vmem>>, vector<1x10xf32>
    %cst_10 = arith.constant 1.000000e+00 : f32
    %10 = vector.broadcast %cst_10 : f32 to vector<1x512xf32>
    %11 = arith.mulf %4, %4 : vector<10x512xf32>
    %cst_11 = arith.constant dense<0.000000e+00> : vector<1x10xf32>
    %12 = tpu.matmul %10, %11, %cst_11 {dimension_numbers = #tpu.dot_dimension_numbers<[1], [1], [0], [0], [0, 0, 1, 0], [], []>} : vector<1x512xf32>, vector<10x512xf32>, vector<1x10xf32> -> vector<1x10xf32>
    %13 = arith.addf %9, %12 : vector<1x10xf32>
    %c0_12 = arith.constant 0 : index
    %c0_13 = arith.constant 0 : index
    %14 = vector.load %arg7[%c0_12, %c0_13] : memref<1x10xf32, #tpu.memory_space<vmem>>, vector<1x10xf32>
    tpu.vector_store %arg7[%c0_12, %c0_13], %13 {strides = array<i32>} : memref<1x10xf32, #tpu.memory_space<vmem>>, vector<1x10xf32>,
    %c1_i32 = arith.constant 1 : i32
    %15 = arith.cmpi eq, %arg1, %c1_i32 : i32
    %16 = arith.extui %15 : i1 to i32
    %c0_i32_14 = arith.constant 0 : i32
    %17 = arith.cmpi ne, %16, %c0_i32_14 : i32
    scf.if %17 {
      %c0_15 = arith.constant 0 : index
      %c0_16 = arith.constant 0 : index
      %18 = vector.load %arg6[%c0_15, %c0_16] : memref<8x10xf32, #tpu.memory_space<vmem>>, vector<8x10xf32>
      %c0_17 = arith.constant 0 : index
      %c0_18 = arith.constant 0 : index
      %19 = vector.load %arg4[%c0_17, %c0_18] : memref<1x10xf32, #tpu.memory_space<vmem>>, vector<1x10xf32>
      %20 = vector.broadcast %19 : vector<1x10xf32> to vector<8x10xf32>
      %21 = arith.addf %18, %20 : vector<8x10xf32>
      %c0_19 = arith.constant 0 : index
      %c0_20 = arith.constant 0 : index
      %22 = vector.load %arg7[%c0_19, %c0_20] : memref<1x10xf32, #tpu.memory_space<vmem>>, vector<1x10xf32>
      %23 = tpu.iota {dimensions = array<i32: 1>} : vector<8x10xi32>
      %24 = tpu.iota {dimensions = array<i32: 1>} : vector<1x2xi32>
      %false = arith.constant false
      %25 = vector.broadcast %false : i1 to vector<8x10xi1>
      %cst_21 = arith.constant 0.000000e+00 : f32
      %26 = vector.broadcast %cst_21 : f32 to vector<1x2xf32>
      %cst_22 = arith.constant 0xFF800000 : f32
      %27 = vector.broadcast %cst_22 : f32 to vector<8x10xf32>
      %28 = arith.select %25, %27, %21 : vector<8x10xi1>, vector<8x10xf32>
      %cst_23 = arith.constant dense<0xFF800000> : vector<8xf32>
      %29 = vector.multi_reduction <maximumf>, %28, %cst_23 [1] : vector<8x10xf32> to vector<8xf32>
      %30 = vector.shape_cast %29 : vector<8xf32> to vector<8x1xf32>
      %31 = vector.broadcast %30 : vector<8x1xf32> to vector<8x10xf32>
      %32 = arith.cmpf oeq, %28, %31 : vector<8x10xf32>
      %c10_i32 = arith.constant 10 : i32
      %33 = vector.broadcast %c10_i32 : i32 to vector<8x10xi32>
      %34 = arith.select %32, %23, %33 : vector<8x10xi1>, vector<8x10xi32>
      %cst_24 = arith.constant dense<2147483647> : vector<8xi32>
      %35 = vector.multi_reduction <minsi>, %34, %cst_24 [1] : vector<8x10xi32> to vector<8xi32>
      %36 = vector.shape_cast %35 : vector<8xi32> to vector<8x1xi32>
      %37 = vector.broadcast %36 : vector<8x1xi32> to vector<8x10xi32>
      %38 = arith.cmpi eq, %23, %37 : vector<8x10xi32>
      %39 = arith.ori %25, %38 : vector<8x10xi1>
      %cst_25 = arith.constant 0.000000e+00 : f32
      %40 = vector.shape_cast %22 : vector<1x10xf32> to vector<1x10xf32>
      %41 = vector.broadcast %40 : vector<1x10xf32> to vector<8x10xf32>
      %42 = vector.broadcast %cst_25 : f32 to vector<8x10xf32>
      %43 = arith.select %38, %41, %42 : vector<8x10xi1>, vector<8x10xf32>
      %cst_26 = arith.constant dense<0.000000e+00> : vector<8xf32>
      %44 = vector.multi_reduction <add>, %43, %cst_26 [1] : vector<8x10xf32> to vector<8xf32>
      %45 = vector.shape_cast %44 : vector<8xf32> to vector<8x1xf32>
      %cst_27 = arith.constant dense<0.000000e+00> : vector<1xf32>
      %46 = vector.multi_reduction <add>, %45, %cst_27 [0] : vector<8x1xf32> to vector<1xf32>
      %47 = vector.shape_cast %46 : vector<1xf32> to vector<1x1xf32>
      %c0_i32_28 = arith.constant 0 : i32
      %48 = vector.broadcast %c0_i32_28 : i32 to vector<1x2xi32>
      %49 = arith.cmpi eq, %24, %48 : vector<1x2xi32>
      %cst_29 = arith.constant 0.000000e+00 : f32
      %50 = vector.shape_cast %47 : vector<1x1xf32> to vector<1x1xf32>
      %51 = vector.broadcast %50 : vector<1x1xf32> to vector<1x2xf32>
      %52 = vector.broadcast %cst_29 : f32 to vector<1x2xf32>
      %53 = arith.select %49, %51, %52 : vector<1x2xi1>, vector<1x2xf32>
      %54 = arith.addf %26, %53 : vector<1x2xf32>
      %cst_30 = arith.constant 0xFF800000 : f32
      %55 = vector.broadcast %cst_30 : f32 to vector<8x10xf32>
      %56 = arith.select %39, %55, %21 : vector<8x10xi1>, vector<8x10xf32>
      %cst_31 = arith.constant dense<0xFF800000> : vector<8xf32>
      %57 = vector.multi_reduction <maximumf>, %56, %cst_31 [1] : vector<8x10xf32> to vector<8xf32>
      %58 = vector.shape_cast %57 : vector<8xf32> to vector<8x1xf32>
      %59 = vector.broadcast %58 : vector<8x1xf32> to vector<8x10xf32>
      %60 = arith.cmpf oeq, %56, %59 : vector<8x10xf32>
      %c10_i32_32 = arith.constant 10 : i32
      %61 = vector.broadcast %c10_i32_32 : i32 to vector<8x10xi32>
      %62 = arith.select %60, %23, %61 : vector<8x10xi1>, vector<8x10xi32>
      %cst_33 = arith.constant dense<2147483647> : vector<8xi32>
      %63 = vector.multi_reduction <minsi>, %62, %cst_33 [1] : vector<8x10xi32> to vector<8xi32>
      %64 = vector.shape_cast %63 : vector<8xi32> to vector<8x1xi32>
      %65 = vector.broadcast %64 : vector<8x1xi32> to vector<8x10xi32>
      %66 = arith.cmpi eq, %23, %65 : vector<8x10xi32>
      %cst_34 = arith.constant 0.000000e+00 : f32
      %67 = vector.shape_cast %22 : vector<1x10xf32> to vector<1x10xf32>
      %68 = vector.broadcast %67 : vector<1x10xf32> to vector<8x10xf32>
      %69 = vector.broadcast %cst_34 : f32 to vector<8x10xf32>
      %70 = arith.select %66, %68, %69 : vector<8x10xi1>, vector<8x10xf32>
      %cst_35 = arith.constant dense<0.000000e+00> : vector<8xf32>
      %71 = vector.multi_reduction <add>, %70, %cst_35 [1] : vector<8x10xf32> to vector<8xf32>
      %72 = vector.shape_cast %71 : vector<8xf32> to vector<8x1xf32>
      %cst_36 = arith.constant dense<0.000000e+00> : vector<1xf32>
      %73 = vector.multi_reduction <add>, %72, %cst_36 [0] : vector<8x1xf32> to vector<1xf32>
      %74 = vector.shape_cast %73 : vector<1xf32> to vector<1x1xf32>
      %c1_i32_37 = arith.constant 1 : i32
      %75 = vector.broadcast %c1_i32_37 : i32 to vector<1x2xi32>
      %76 = arith.cmpi eq, %24, %75 : vector<1x2xi32>
      %cst_38 = arith.constant 0.000000e+00 : f32
      %77 = vector.shape_cast %74 : vector<1x1xf32> to vector<1x1xf32>
      %78 = vector.broadcast %77 : vector<1x1xf32> to vector<1x2xf32>
      %79 = vector.broadcast %cst_38 : f32 to vector<1x2xf32>
      %80 = arith.select %76, %78, %79 : vector<1x2xi1>, vector<1x2xf32>
      %81 = arith.addf %54, %80 : vector<1x2xf32>
      %c0_39 = arith.constant 0 : index
      %c0_40 = arith.constant 0 : index
      %c0_41 = arith.constant 0 : index
      %82 = vector.load %arg5[%c0_39, %c0_40, %c0_41] : memref<1x1x2xf32, #tpu.memory_space<vmem>>, vector<1x1x2xf32>
      %83 = vector.shape_cast %82 : vector<1x1x2xf32> to vector<1x2xf32>
      %84 = vector.shape_cast %81 : vector<1x2xf32> to vector<1x1x2xf32>
      tpu.vector_store %arg5[%c0_39, %c0_40, %c0_41], %84 {strides = array<i32>} : memref<1x1x2xf32, #tpu.memory_space<vmem>>, vector<1x1x2xf32>,
    } else {
    }
    return
  }
  func.func @transform_0(%arg0: i32, %arg1: i32) -> (i32, i32) {
    %c0_i32 = arith.constant 0 : i32
    return %arg0, %arg1 : i32, i32
  }
  func.func @transform_1(%arg0: i32, %arg1: i32) -> (i32, i32) {
    %c0_i32 = arith.constant 0 : i32
    %c0_i32_0 = arith.constant 0 : i32
    return %c0_i32, %arg1 : i32, i32
  }
  func.func @transform_2(%arg0: i32, %arg1: i32) -> (i32, i32) {
    %c0_i32 = arith.constant 0 : i32
    %c0_i32_0 = arith.constant 0 : i32
    %c0_i32_1 = arith.constant 0 : i32
    return %c0_i32, %c0_i32_0 : i32, i32
  }
  func.func @transform_3(%arg0: i32, %arg1: i32) -> (i32, i32, i32) {
    %c0_i32 = arith.constant 0 : i32
    %c0_i32_0 = arith.constant 0 : i32
    %c0_i32_1 = arith.constant 0 : i32
    return %arg0, %c0_i32, %c0_i32_0 : i32, i32, i32
  }
}

</mosaic_0001>

<llo_original>
// kernel: tpu_custom_call.1
$region0: #{tpu_custom_call.1}
  #allocation0 [shape = 'u32[]', space=smem, size = 0x4, offset = 0x4, fixed_abs, tag = 'smem constant byte address 0x4 - core index']
  #allocation1 [shape = 'u32[144,128]{1,0:T(1,128)}', space=vmem, size = 0x12000, scoped, tag = 'internal scratch']
  #allocation2 [shape = 'f32[8,10]{1,0:T(8,128)}', space=vmem, size = 0x1000, scoped, tag = 'scratch operand']
  #allocation3 [shape = 'f32[1,10]{1,0:T(1,128)}', space=vmem, size = 0x200, scoped, tag = 'scratch operand']
  %s0 = inlined_call_operand.hbm [shape: f32[16,1024], index: 0, kind: input, shape index: {}]
  %s1 = inlined_call_operand.hbm [shape: f32[10,1024], index: 1, kind: input, shape index: {}]
  %s2 = inlined_call_operand.vmem [shape: f32[1,10], index: 2, kind: input, shape index: {}]
  %s3 = inlined_call_operand.hbm [shape: f32[2,1,2], index: 3, kind: output, shape index: {}]
  %s4 = sld [smem:[#allocation0]]
  $region61: #{tpu_custom_call.1} parent=0
    _
  %s6 = ssub.s32 1, %s4
  %s7 = scalar_select 0, %s6, %s4
  $region1: #{tpu_custom_call.1} parent=0
    #allocation4 [shape = 'u8[32768]{0}', space=vmem, size = 0x8000, scoped, tag = 'input window, operand 0']
    #allocation5 [shape = 's32[2]{0}', space=sflag, size = 0x8, scoped, tag = 'scoped memory for tpu_custom_call.1']
    #allocation6 [shape = 's32[2]{0}', space=sflag, size = 0x8, scoped, tag = 'scoped memory for tpu_custom_call.1']
    #allocation7 [shape = 'u8[65536]{0}', space=vmem, size = 0x10000, scoped, tag = 'input window, operand 1']
    #allocation8 [shape = 's32[2]{0}', space=sflag, size = 0x8, scoped, tag = 'scoped memory for tpu_custom_call.1']
    #allocation9 [shape = 'u8[1024]{0}', space=vmem, size = 0x400, scoped, tag = 'output window, operand 0']
    %8 = vsyncpa [#allocation5], 0
    %s9 = scalar_lea.sflag [#allocation5], 1
    %10 = vsyncpa %s9, 0
    %11 = vsyncpa [#allocation8], 0
    %s12 = scalar_lea.sflag [#allocation8], 1
    %13 = vsyncpa %s12, 0
    %14 = vsyncpa [#allocation6], 0
    %s15 = scalar_lea.sflag [#allocation6], 1
    %16 = vsyncpa %s15, 0
    loop: start=0, step=1, limit=6
    $region2: #{tpu_custom_call.1} parent=1 // loop_pre_header
      _
    $region3: #{tpu_custom_call.1} parent=1 // loop_header
      %s18 = sphi 0, %s22
      %p19 = scmp.ge.s32.totalorder %s18, 6
      %s25 = sphi 0, %s37
      %s26 = sphi 0, %s33
      %s27 = sphi 0, %s25
      %s28 = sphi 0, %s26
      %s29 = sphi 0, %s27
      %s30 = sphi 0, %s28
      %s42 = sphi 0, %s44
      %s45 = sphi 0, %s42
      %s46 = sphi 0, %s45
      %s62 = sphi 0, %s46
      %s68 = sphi 0, %s70
      %s71 = sphi 0, %s68
      %s72 = sphi 0, %s71
      %s88 = sphi 0, %s72
      %s92 = sphi 0, %s92
      %s94 = sphi 0, %s92
      %s95 = sphi 0, %s94
      %s109 = sphi 0, %s95
      %s115 = sphi 0, %s117
      %s118 = sphi 0, %s115
      %s119 = sphi 0, %s118
      %s135 = sphi 0, %s119
    $region4: #{tpu_custom_call.1} parent=1 // loop_header_branch
      %21 = sbr.rel (%p19) target = $region8
    $region5: #{tpu_custom_call.1} parent=1 // loop_body
      %s23 = ssub.s32 %s18, 1
      %s24 = ssub.s32 %s18, 2
      %s31 = sadd.s32 1, %s26
      %p32 = scmp.ge.s32.totalorder %s31, 2
      %s33 = scalar_select %p32, 0, %s31
      %s34 = sadd.s32 1, %s25
      %s35 = scalar_select %p32, %s34, %s25
      %p36 = scmp.ge.s32.totalorder %s35, 2
      %s37 = scalar_select %p36, 0, %s35
      %s38 = ssub.s32 %s25, %s37
      %s39 = ssub.s32 %s26, %s33
      %s40 = sor.u32 %s38, %s39
      %p41 = scmp.eq.s32.totalorder %s40, 0
      %s43 = sadd.s32 %s42, 1
      %s44 = scalar_select %p41, %s42, %s43
      %p47 = pneg %p41
      %p48 = scmp.eq.s32.totalorder %s18, 3
      %p49 = por %p47, %p48
      %p50 = scmp.ne.s32.totalorder %s42, %s45
      %p51 = scmp.eq.s32.totalorder %s18, 0
      %p52 = por %p50, %p51
      %p53 = scmp.ne.s32.totalorder %s42, %s45
      %p54 = scmp.eq.s32.totalorder %s23, 3
      %p55 = por %p53, %p54
      %p56 = scmp.ne.s32.totalorder %s45, %s46
      %p57 = scmp.eq.s32.totalorder %s23, 0
      %p58 = por %p56, %p57
      %p59 = scmp.ne.s32.totalorder %s45, %s46
      %p60 = scmp.eq.s32.totalorder %s24, 3
      %p61 = por %p59, %p60
      %p63 = scmp.ne.s32.totalorder %s46, %s62
      %p64 = scmp.eq.s32.totalorder %s24, 0
      %p65 = por %p63, %p64
      %s66 = ssub.s32 %s26, %s33
      %p67 = scmp.eq.s32.totalorder %s66, 0
      %s69 = sadd.s32 %s68, 1
      %s70 = scalar_select %p67, %s68, %s69
      %p73 = pneg %p67
      %p74 = scmp.eq.s32.totalorder %s18, 3
      %p75 = por %p73, %p74
      %p76 = scmp.ne.s32.totalorder %s68, %s71
      %p77 = scmp.eq.s32.totalorder %s18, 0
      %p78 = por %p76, %p77
      %p79 = scmp.ne.s32.totalorder %s68, %s71
      %p80 = scmp.eq.s32.totalorder %s23, 3
      %p81 = por %p79, %p80
      %p82 = scmp.ne.s32.totalorder %s71, %s72
      %p83 = scmp.eq.s32.totalorder %s23, 0
      %p84 = por %p82, %p83
      %p85 = scmp.ne.s32.totalorder %s71, %s72
      %p86 = scmp.eq.s32.totalorder %s24, 3
      %p87 = por %p85, %p86
      %p89 = scmp.ne.s32.totalorder %s72, %s88
      %p90 = scmp.eq.s32.totalorder %s24, 0
      %p91 = por %p89, %p90
      %s93 = sadd.s32 %s92, 1
      %p96 = scmp.eq.s32.totalorder %s18, 3
      %p97 = scmp.ne.s32.totalorder %s92, %s94
      %p98 = scmp.eq.s32.totalorder %s18, 0
      %p99 = por %p97, %p98
      %p100 = scmp.ne.s32.totalorder %s92, %s94
      %p101 = scmp.eq.s32.totalorder %s23, 3
      %p102 = por %p100, %p101
      %p103 = scmp.ne.s32.totalorder %s94, %s95
      %p104 = scmp.eq.s32.totalorder %s23, 0
      %p105 = por %p103, %p104
      %p106 = scmp.ne.s32.totalorder %s94, %s95
      %p107 = scmp.eq.s32.totalorder %s24, 3
      %p108 = por %p106, %p107
      %p110 = scmp.ne.s32.totalorder %s95, %s109
      %p111 = scmp.eq.s32.totalorder %s24, 0
      %p112 = por %p110, %p111
      %s113 = ssub.s32 %s25, %s37
      %p114 = scmp.eq.s32.totalorder %s113, 0
      %s116 = sadd.s32 %s115, 1
      %s117 = scalar_select %p114, %s115, %s116
      %p120 = pneg %p114
      %p121 = scmp.eq.s32.totalorder %s18, 3
      %p122 = por %p120, %p121
      %p123 = scmp.ne.s32.totalorder %s115, %s118
      %p124 = scmp.eq.s32.totalorder %s18, 0
      %p125 = por %p123, %p124
      %p126 = scmp.ne.s32.totalorder %s115, %s118
      %p127 = scmp.eq.s32.totalorder %s23, 3
      %p128 = por %p126, %p127
      %p129 = scmp.ne.s32.totalorder %s118, %s119
      %p130 = scmp.eq.s32.totalorder %s23, 0
      %p131 = por %p129, %p130
      %p132 = scmp.ne.s32.totalorder %s118, %s119
      %p133 = scmp.eq.s32.totalorder %s24, 3
      %p134 = por %p132, %p133
      %p136 = scmp.ne.s32.totalorder %s119, %s135
      %p137 = scmp.eq.s32.totalorder %s24, 0
      %p138 = por %p136, %p137
      %p139 = scmp.le.s32.totalorder 1, %s18
      %p140 = scmp.lt.s32.totalorder %s18, 5
      %p141 = pnand %p139, %p140
      %p142 = pneg %p141
      // Predicated region
      $region9: #{tpu_custom_call.1} parent=5 // pred_check
        _
      $region10: #{tpu_custom_call.1} parent=5 // pred_check_branch
        %144 = sbr.rel (%p141) target = $region12
      $region11: #{tpu_custom_call.1} parent=5 // pred_region
        %s145 = ssub.s32 %s18, 1
        // Predicated region
        $region13: #{tpu_custom_call.1} parent=11 // pred_check
          %p146 = pneg %p105
        $region14: #{tpu_custom_call.1} parent=11 // pred_check_branch
          %148 = sbr.rel (%p146) target = $region16
        $region15: #{tpu_custom_call.1} parent=11 // pred_region
          _
        $region16: #{tpu_custom_call.1} parent=11 // pred_fallthru
          _
      $region12: #{tpu_custom_call.1} parent=5 // pred_fallthru
        _
      %p149 = scmp.lt.s32.totalorder %s18, 4
      // Predicated region
      $region17: #{tpu_custom_call.1} parent=5 // pred_check
        %p150 = pneg %p149
      $region18: #{tpu_custom_call.1} parent=5 // pred_check_branch
        %152 = sbr.rel (%p150) target = $region20
      $region19: #{tpu_custom_call.1} parent=5 // pred_region
        // Predicated region
        $region21: #{tpu_custom_call.1} parent=19 // pred_check
          %p153 = pneg %p52
        $region22: #{tpu_custom_call.1} parent=19 // pred_check_branch
          %155 = sbr.rel (%p153) target = $region24
        $region23: #{tpu_custom_call.1} parent=19 // pred_region
          %s156 = sand.u32 %s42, 1
          %s157 = scalar_lea.sflag [#allocation5], %s156
          %s158 = sand.u32 %s42, 1
          %s159 = smul.addr %s158, 32
          %s160 = scalar_lea.vmem [#allocation4], %s159
          %s161 = smul.u32 4, %s26
          %s163 = ssub.s32 512, 512
          %164 = vsyncadd %s157, %s163
          %s165 = smul.addr %s25, 8
          %s166 = sadd.s32 %s161, %s165
          %s167 = smul.addr %s166, 128
          %s168 = scalar_lea.hbm %s0, %s167
          %s170 = sshll.u32 %s160, 4
          %s171 = int_to_ptr.vmem [resolvable:$true] %s170
          %173 = dma.hbm_to_vmem [thread:$0]  %s168, 512, %s171, %s157
        $region24: #{tpu_custom_call.1} parent=19 // pred_fallthru
          _
        // Predicated region
        $region25: #{tpu_custom_call.1} parent=19 // pred_check
          %p174 = pneg %p78
        $region26: #{tpu_custom_call.1} parent=19 // pred_check_branch
          %176 = sbr.rel (%p174) target = $region28
        $region27: #{tpu_custom_call.1} parent=19 // pred_region
          %s177 = sand.u32 %s68, 1
          %s178 = scalar_lea.sflag [#allocation8], %s177
          %s179 = sand.u32 %s68, 1
          %s180 = smul.addr %s179, 64
          %s181 = scalar_lea.vmem [#allocation7], %s180
          %s182 = smul.u32 4, %s26
          %s184 = ssub.s32 1024, 1024
          %185 = vsyncadd %s178, %s184
          %s186 = smul.addr %s182, 128
          %s187 = scalar_lea.hbm %s1, %s186
          %s188 = sshll.u32 %s181, 4
          %s189 = int_to_ptr.vmem [resolvable:$true] %s188
          %194 = dma.hbm_to_vmem [thread:$0]  %s187, 1024, %s189, %s178, 1024, 512, 32
        $region28: #{tpu_custom_call.1} parent=19 // pred_fallthru
          _
      $region20: #{tpu_custom_call.1} parent=5 // pred_fallthru
        _
      %p195 = scmp.le.s32.totalorder 1, %s18
      %p196 = scmp.lt.s32.totalorder %s18, 5
      %p197 = pnand %p195, %p196
      %p198 = pneg %p197
      // Predicated region
      $region29: #{tpu_custom_call.1} parent=5 // pred_check
        _
      $region30: #{tpu_custom_call.1} parent=5 // pred_check_branch
        %200 = sbr.rel (%p197) target = $region32
      $region31: #{tpu_custom_call.1} parent=5 // pred_region
        %s201 = ssub.s32 %s18, 1
        %s202 = sand.u32 %s45, 1
        %s203 = scalar_lea.sflag [#allocation5], %s202
        %s204 = sand.u32 %s45, 1
        %s205 = smul.addr %s204, 32
        %s206 = scalar_lea.vmem [#allocation4], %s205
        // Predicated region
        $region33: #{tpu_custom_call.1} parent=31 // pred_check
          %p207 = pneg %p58
        $region34: #{tpu_custom_call.1} parent=31 // pred_check_branch
          %209 = sbr.rel (%p207) target = $region36
        $region35: #{tpu_custom_call.1} parent=31 // pred_region
          %210 = dma.done %s203, 512
        $region36: #{tpu_custom_call.1} parent=31 // pred_fallthru
          _
        %s211 = sand.u32 %s71, 1
        %s212 = scalar_lea.sflag [#allocation8], %s211
        %s213 = sand.u32 %s71, 1
        %s214 = smul.addr %s213, 64
        %s215 = scalar_lea.vmem [#allocation7], %s214
        // Predicated region
        $region37: #{tpu_custom_call.1} parent=31 // pred_check
          %p216 = pneg %p84
        $region38: #{tpu_custom_call.1} parent=31 // pred_check_branch
          %218 = sbr.rel (%p216) target = $region40
        $region39: #{tpu_custom_call.1} parent=31 // pred_region
          %219 = dma.done %s212, 1024
        $region40: #{tpu_custom_call.1} parent=31 // pred_fallthru
          _
        %s220 = sand.u32 %s45, 1
        %s221 = scalar_lea.sflag [#allocation5], %s220
        %s222 = sand.u32 %s45, 1
        %s223 = smul.addr %s222, 32
        %s224 = scalar_lea.vmem [#allocation4], %s223
        %p225 = pneg %p58
        %p226 = pneg %p55
        %s227 = sand.u32 %s71, 1
        %s228 = scalar_lea.sflag [#allocation8], %s227
        %s229 = sand.u32 %s71, 1
        %s230 = smul.addr %s229, 64
        %s231 = scalar_lea.vmem [#allocation7], %s230
        %p232 = pneg %p84
        %p233 = pneg %p81
        %p234 = pneg %p105
        %p235 = pneg %p102
        %p236 = pneg %p131
        %p237 = pneg %p128
        %s238 = sand.u32 %s118, 1
        %s239 = scalar_lea.sflag [#allocation6], %s238
        %s240 = sand.u32 %s118, 1
        %s241 = scalar_lea.vmem [#allocation9], %s240
        %s242 = smul.u32 4, %s28
        %s243 = smul.u32 4, %s28
        %p244 = scmp.eq.s32.totalorder %s28, 0
        // Predicated region
        $region41: #{tpu_custom_call.1} parent=31 // pred_check
          %p245 = pneg %p244
        $region42: #{tpu_custom_call.1} parent=31 // pred_check_branch
          %247 = sbr.rel (%p245) target = $region44
        $region43: #{tpu_custom_call.1} parent=31 // pred_region
          %vm248 = vcmask 80896
          %249 = vst.msk [vmem:[#allocation2] sm:$0xff] %vm248, 0.0
          %vm250 = vcmask 73728
          %251 = vst.msk [vmem:[#allocation3] sm:$0x1] %vm250, 0.0
        $region44: #{tpu_custom_call.1} parent=31 // pred_fallthru
          _
        %v252 = vld [vmem:[%s206] sm:$0xff]
        %v253 = vld [vmem:[%s206 + $0x8] sm:$0xff]
        %v254 = vld [vmem:[%s206 + $0x10] sm:$0xff]
        %v255 = vld [vmem:[%s206 + $0x18] sm:$0xff]
        %v256 = vld [vmem:[%s215] sm:$0xff]
        %v257 = vld [vmem:[%s215 + $0x8] sm:$0xff]
        %v258 = vld [vmem:[%s215 + $0x10] sm:$0xff]
        %v259 = vld [vmem:[%s215 + $0x18] sm:$0xff]
        %v260 = vld [vmem:[%s215 + $0x20] sm:$0x3]
        %v261 = vld [vmem:[%s215 + $0x28] sm:$0x3]
        %v262 = vld [vmem:[%s215 + $0x30] sm:$0x3]
        %v263 = vld [vmem:[%s215 + $0x38] sm:$0x3]
        %v264 = vld [vmem:[#allocation2] sm:$0xff]
        %265 = vmatprep.subr.mxu0 %v257
        %266 = vmatpush1.xpose.msra.mxu0 %v256
        %267 = vmatprep.subr.mxu0 %v261
        %268 = vmatpush1.xpose.msra.mxu0 %v260
        %269 = vmatprep.subr.mxu0 0.0
        %270 = vmatpush1.xpose.msra.mxu0 0.0
        %271 = vmatprep.subr.mxu0 0.0
        %272 = vmatpush1.xpose.msra.mxu0 0.0
        %273 = vmatprep.subr.mxu0 0.0
        %274 = vmatpush1.xpose.msra.mxu0 0.0
        %275 = vmatprep.subr.mxu0 0.0
        %276 = vmatpush1.xpose.msra.mxu0 0.0
        %277 = vmatprep.subr.mxu0 0.0
        %278 = vmatpush1.xpose.msra.mxu0 0.0
        %279 = vmatprep.subr.mxu0 0.0
        %280 = vmatpush1.xpose.msra.mxu0 0.0
        %281 = vmatprep.subr.mxu0 0.0
        %282 = vmatpush1.xpose.msra.mxu0 0.0
        %283 = vmatprep.subr.mxu0 0.0
        %284 = vmatpush1.xpose.msra.mxu0 0.0
        %285 = vmatprep.subr.mxu0 0.0
        %286 = vmatpush1.xpose.msra.mxu0 0.0
        %287 = vmatprep.subr.mxu0 0.0
        %288 = vmatpush1.xpose.msra.mxu0 0.0
        %289 = vmatprep.subr.mxu0 0.0
        %290 = vmatpush1.xpose.msra.mxu0 0.0
        %291 = vmatprep.subr.mxu0 0.0
        %292 = vmatpush1.xpose.msra.mxu0 0.0
        %293 = vmatprep.subr.mxu0 0.0
        %294 = vmatpush1.xpose.msra.mxu0 0.0
        %295 = vmatprep.subr.mxu0 0.0
        %296 = vmatpush1.xpose.msra.mxu0 0.0
        %297 = vmatprep.subr.mxu0 0.0
        %298 = vmatpush1.xpose.msra.mxu0 0.0
        %299 = vmatprep.subr.mxu0 0.0
        %300 = vmatpush1.xpose.msra.mxu0 0.0
        %301 = vmatprep.subr.mxu0 0.0
        %302 = vmatpush1.xpose.msra.mxu0 0.0
        %303 = vmatprep.subr.mxu0 0.0
        %304 = vmatpush1.xpose.msra.mxu0 0.0
        %305 = vmatprep.subr.mxu0 0.0
        %306 = vmatpush1.xpose.msra.mxu0 0.0
        %307 = vmatprep.subr.mxu0 0.0
        %308 = vmatpush1.xpose.msra.mxu0 0.0
        %309 = vmatprep.subr.mxu0 0.0
        %310 = vmatpush1.xpose.msra.mxu0 0.0
        %311 = vmatprep.subr.mxu0 0.0
        %312 = vmatpush1.xpose.msra.mxu0 0.0
        %313 = vmatprep.subr.mxu0 0.0
        %314 = vmatpush1.xpose.msra.mxu0 0.0
        %315 = vmatprep.subr.mxu0 0.0
        %316 = vmatpush1.xpose.msra.mxu0 0.0
        %317 = vmatprep.subr.mxu0 0.0
        %318 = vmatpush1.xpose.msra.mxu0 0.0
        %319 = vmatprep.subr.mxu0 0.0
        %320 = vmatpush1.xpose.msra.mxu0 0.0
        %321 = vmatprep.subr.mxu0 0.0
        %322 = vmatpush1.xpose.msra.mxu0 0.0
        %323 = vmatprep.subr.mxu0 0.0
        %324 = vmatpush1.xpose.msra.mxu0 0.0
        %325 = vmatprep.subr.mxu0 0.0
        %326 = vmatpush1.xpose.msra.mxu0 0.0
        %327 = vmatprep.subr.mxu0 0.0
        %328 = vmatpush1.xpose.msra.mxu0 0.0
        %329 = vmatprep.mubr.f32.mxu0 %v253
        %330 = vmatmul.mubr.f32.gmra.mrb[0].mxu0 %v252
        %v331 = vpop.f32.mrb[0].mxu0
        %v332 = vadd.f32 0.0, %v331
        %v333 = vpop.f32.mrb[0].mxu0
        %334 = vdwg.mxu0
        %335 = vmatprep.subr.mxu0 %v259
        %336 = vmatpush1.xpose.msra.mxu0 %v258
        %337 = vmatprep.subr.mxu0 %v263
        %338 = vmatpush1.xpose.msra.mxu0 %v262
        %339 = vmatprep.subr.mxu0 0.0
        %340 = vmatpush1.xpose.msra.mxu0 0.0
        %341 = vmatprep.subr.mxu0 0.0
        %342 = vmatpush1.xpose.msra.mxu0 0.0
        %343 = vmatprep.subr.mxu0 0.0
        %344 = vmatpush1.xpose.msra.mxu0 0.0
        %345 = vmatprep.subr.mxu0 0.0
        %346 = vmatpush1.xpose.msra.mxu0 0.0
        %347 = vmatprep.subr.mxu0 0.0
        %348 = vmatpush1.xpose.msra.mxu0 0.0
        %349 = vmatprep.subr.mxu0 0.0
        %350 = vmatpush1.xpose.msra.mxu0 0.0
        %351 = vmatprep.subr.mxu0 0.0
        %352 = vmatpush1.xpose.msra.mxu0 0.0
        %353 = vmatprep.subr.mxu0 0.0
        %354 = vmatpush1.xpose.msra.mxu0 0.0
        %355 = vmatprep.subr.mxu0 0.0
        %356 = vmatpush1.xpose.msra.mxu0 0.0
        %357 = vmatprep.subr.mxu0 0.0
        %358 = vmatpush1.xpose.msra.mxu0 0.0
        %359 = vmatprep.subr.mxu0 0.0
        %360 = vmatpush1.xpose.msra.mxu0 0.0
        %361 = vmatprep.subr.mxu0 0.0
        %362 = vmatpush1.xpose.msra.mxu0 0.0
        %363 = vmatprep.subr.mxu0 0.0
        %364 = vmatpush1.xpose.msra.mxu0 0.0
        %365 = vmatprep.subr.mxu0 0.0
        %366 = vmatpush1.xpose.msra.mxu0 0.0
        %367 = vmatprep.subr.mxu0 0.0
        %368 = vmatpush1.xpose.msra.mxu0 0.0
        %369 = vmatprep.subr.mxu0 0.0
        %370 = vmatpush1.xpose.msra.mxu0 0.0
        %371 = vmatprep.subr.mxu0 0.0
        %372 = vmatpush1.xpose.msra.mxu0 0.0
        %373 = vmatprep.subr.mxu0 0.0
        %374 = vmatpush1.xpose.msra.mxu0 0.0
        %375 = vmatprep.subr.mxu0 0.0
        %376 = vmatpush1.xpose.msra.mxu0 0.0
        %377 = vmatprep.subr.mxu0 0.0
        %378 = vmatpush1.xpose.msra.mxu0 0.0
        %379 = vmatprep.subr.mxu0 0.0
        %380 = vmatpush1.xpose.msra.mxu0 0.0
        %381 = vmatprep.subr.mxu0 0.0
        %382 = vmatpush1.xpose.msra.mxu0 0.0
        %383 = vmatprep.subr.mxu0 0.0
        %384 = vmatpush1.xpose.msra.mxu0 0.0
        %385 = vmatprep.subr.mxu0 0.0
        %386 = vmatpush1.xpose.msra.mxu0 0.0
        %387 = vmatprep.subr.mxu0 0.0
        %388 = vmatpush1.xpose.msra.mxu0 0.0
        %389 = vmatprep.subr.mxu0 0.0
        %390 = vmatpush1.xpose.msra.mxu0 0.0
        %391 = vmatprep.subr.mxu0 0.0
        %392 = vmatpush1.xpose.msra.mxu0 0.0
        %393 = vmatprep.subr.mxu0 0.0
        %394 = vmatpush1.xpose.msra.mxu0 0.0
        %395 = vmatprep.subr.mxu0 0.0
        %396 = vmatpush1.xpose.msra.mxu0 0.0
        %397 = vmatprep.subr.mxu0 0.0
        %398 = vmatpush1.xpose.msra.mxu0 0.0
        %399 = vmatprep.mubr.f32.mxu0 %v255
        %400 = vmatmul.mubr.f32.gmra.mrb[0].mxu0 %v254
        %v401 = vpop.f32.mrb[0].mxu0
        %v402 = vadd.f32 %v332, %v401
        %v403 = vpop.f32.mrb[0].mxu0
        %404 = vdwg.mxu0
        %v405 = vadd.f32 %v264, %v402
        %vm406 = vcmask 80896
        %407 = vst.msk [vmem:[#allocation2] sm:$0xff] %vm406, %v405
        %v408 = vld [vmem:[#allocation3] sm:$0x1]
        %v409 = vmul.f32 %v256, %v256
        %v410 = vmul.f32 %v257, %v257
        %v411 = vmul.f32 %v258, %v258
        %v412 = vmul.f32 %v259, %v259
        %v413 = vmul.f32 %v260, %v260
        %v414 = vmul.f32 %v261, %v261
        %v415 = vmul.f32 %v262, %v262
        %v416 = vmul.f32 %v263, %v263
        %417 = vmatprep.subr.mxu0 %v410
        %418 = vmatpush1.xpose.msra.mxu0 %v409
        %419 = vmatprep.subr.mxu0 %v414
        %420 = vmatpush1.xpose.msra.mxu0 %v413
        %421 = vmatprep.subr.mxu0 0.0
        %422 = vmatpush1.xpose.msra.mxu0 0.0
        %423 = vmatprep.subr.mxu0 0.0
        %424 = vmatpush1.xpose.msra.mxu0 0.0
        %425 = vmatprep.subr.mxu0 0.0
        %426 = vmatpush1.xpose.msra.mxu0 0.0
        %427 = vmatprep.subr.mxu0 0.0
        %428 = vmatpush1.xpose.msra.mxu0 0.0
        %429 = vmatprep.subr.mxu0 0.0
        %430 = vmatpush1.xpose.msra.mxu0 0.0
        %431 = vmatprep.subr.mxu0 0.0
        %432 = vmatpush1.xpose.msra.mxu0 0.0
        %433 = vmatprep.subr.mxu0 0.0
        %434 = vmatpush1.xpose.msra.mxu0 0.0
        %435 = vmatprep.subr.mxu0 0.0
        %436 = vmatpush1.xpose.msra.mxu0 0.0
        %437 = vmatprep.subr.mxu0 0.0
        %438 = vmatpush1.xpose.msra.mxu0 0.0
        %439 = vmatprep.subr.mxu0 0.0
        %440 = vmatpush1.xpose.msra.mxu0 0.0
        %441 = vmatprep.subr.mxu0 0.0
        %442 = vmatpush1.xpose.msra.mxu0 0.0
        %443 = vmatprep.subr.mxu0 0.0
        %444 = vmatpush1.xpose.msra.mxu0 0.0
        %445 = vmatprep.subr.mxu0 0.0
        %446 = vmatpush1.xpose.msra.mxu0 0.0
        %447 = vmatprep.subr.mxu0 0.0
        %448 = vmatpush1.xpose.msra.mxu0 0.0
        %449 = vmatprep.subr.mxu0 0.0
        %450 = vmatpush1.xpose.msra.mxu0 0.0
        %451 = vmatprep.subr.mxu0 0.0
        %452 = vmatpush1.xpose.msra.mxu0 0.0
        %453 = vmatprep.subr.mxu0 0.0
        %454 = vmatpush1.xpose.msra.mxu0 0.0
        %455 = vmatprep.subr.mxu0 0.0
        %456 = vmatpush1.xpose.msra.mxu0 0.0
        %457 = vmatprep.subr.mxu0 0.0
        %458 = vmatpush1.xpose.msra.mxu0 0.0
        %459 = vmatprep.subr.mxu0 0.0
        %460 = vmatpush1.xpose.msra.mxu0 0.0
        %461 = vmatprep.subr.mxu0 0.0
        %462 = vmatpush1.xpose.msra.mxu0 0.0
        %463 = vmatprep.subr.mxu0 0.0
        %464 = vmatpush1.xpose.msra.mxu0 0.0
        %465 = vmatprep.subr.mxu0 0.0
        %466 = vmatpush1.xpose.msra.mxu0 0.0
        %467 = vmatprep.subr.mxu0 0.0
        %468 = vmatpush1.xpose.msra.mxu0 0.0
        %469 = vmatprep.subr.mxu0 0.0
        %470 = vmatpush1.xpose.msra.mxu0 0.0
        %471 = vmatprep.subr.mxu0 0.0
        %472 = vmatpush1.xpose.msra.mxu0 0.0
        %473 = vmatprep.subr.mxu0 0.0
        %474 = vmatpush1.xpose.msra.mxu0 0.0
        %475 = vmatprep.subr.mxu0 0.0
        %476 = vmatpush1.xpose.msra.mxu0 0.0
        %477 = vmatprep.subr.mxu0 0.0
        %478 = vmatpush1.xpose.msra.mxu0 0.0
        %479 = vmatprep.subr.mxu0 0.0
        %480 = vmatpush1.xpose.msra.mxu0 0.0
        %481 = vmatprep.mubr.f32.mxu0 1.0
        %482 = vmatmul.mubr.f32.gmra.mrb[0].mxu0 1.0
        %v483 = vpop.f32.mrb[0].mxu0
        %v484 = vadd.f32 0.0, %v483
        %v485 = vpop.f32.mrb[0].mxu0
        %486 = vdwg.mxu0
        %487 = vmatprep.subr.mxu0 %v412
        %488 = vmatpush1.xpose.msra.mxu0 %v411
        %489 = vmatprep.subr.mxu0 %v416
        %490 = vmatpush1.xpose.msra.mxu0 %v415
        %491 = vmatprep.subr.mxu0 0.0
        %492 = vmatpush1.xpose.msra.mxu0 0.0
        %493 = vmatprep.subr.mxu0 0.0
        %494 = vmatpush1.xpose.msra.mxu0 0.0
        %495 = vmatprep.subr.mxu0 0.0
        %496 = vmatpush1.xpose.msra.mxu0 0.0
        %497 = vmatprep.subr.mxu0 0.0
        %498 = vmatpush1.xpose.msra.mxu0 0.0
        %499 = vmatprep.subr.mxu0 0.0
        %500 = vmatpush1.xpose.msra.mxu0 0.0
        %501 = vmatprep.subr.mxu0 0.0
        %502 = vmatpush1.xpose.msra.mxu0 0.0
        %503 = vmatprep.subr.mxu0 0.0
        %504 = vmatpush1.xpose.msra.mxu0 0.0
        %505 = vmatprep.subr.mxu0 0.0
        %506 = vmatpush1.xpose.msra.mxu0 0.0
        %507 = vmatprep.subr.mxu0 0.0
        %508 = vmatpush1.xpose.msra.mxu0 0.0
        %509 = vmatprep.subr.mxu0 0.0
        %510 = vmatpush1.xpose.msra.mxu0 0.0
        %511 = vmatprep.subr.mxu0 0.0
        %512 = vmatpush1.xpose.msra.mxu0 0.0
        %513 = vmatprep.subr.mxu0 0.0
        %514 = vmatpush1.xpose.msra.mxu0 0.0
        %515 = vmatprep.subr.mxu0 0.0
        %516 = vmatpush1.xpose.msra.mxu0 0.0
        %517 = vmatprep.subr.mxu0 0.0
        %518 = vmatpush1.xpose.msra.mxu0 0.0
        %519 = vmatprep.subr.mxu0 0.0
        %520 = vmatpush1.xpose.msra.mxu0 0.0
        %521 = vmatprep.subr.mxu0 0.0
        %522 = vmatpush1.xpose.msra.mxu0 0.0
        %523 = vmatprep.subr.mxu0 0.0
        %524 = vmatpush1.xpose.msra.mxu0 0.0
        %525 = vmatprep.subr.mxu0 0.0
        %526 = vmatpush1.xpose.msra.mxu0 0.0
        %527 = vmatprep.subr.mxu0 0.0
        %528 = vmatpush1.xpose.msra.mxu0 0.0
        %529 = vmatprep.subr.mxu0 0.0
        %530 = vmatpush1.xpose.msra.mxu0 0.0
        %531 = vmatprep.subr.mxu0 0.0
        %532 = vmatpush1.xpose.msra.mxu0 0.0
        %533 = vmatprep.subr.mxu0 0.0
        %534 = vmatpush1.xpose.msra.mxu0 0.0
        %535 = vmatprep.subr.mxu0 0.0
        %536 = vmatpush1.xpose.msra.mxu0 0.0
        %537 = vmatprep.subr.mxu0 0.0
        %538 = vmatpush1.xpose.msra.mxu0 0.0
        %539 = vmatprep.subr.mxu0 0.0
        %540 = vmatpush1.xpose.msra.mxu0 0.0
        %541 = vmatprep.subr.mxu0 0.0
        %542 = vmatpush1.xpose.msra.mxu0 0.0
        %543 = vmatprep.subr.mxu0 0.0
        %544 = vmatpush1.xpose.msra.mxu0 0.0
        %545 = vmatprep.subr.mxu0 0.0
        %546 = vmatpush1.xpose.msra.mxu0 0.0
        %547 = vmatprep.subr.mxu0 0.0
        %548 = vmatpush1.xpose.msra.mxu0 0.0
        %549 = vmatprep.subr.mxu0 0.0
        %550 = vmatpush1.xpose.msra.mxu0 0.0
        %551 = vmatprep.mubr.f32.mxu0 1.0
        %552 = vmatmul.mubr.f32.gmra.mrb[0].mxu0 1.0
        %v553 = vpop.f32.mrb[0].mxu0
        %v554 = vadd.f32 %v484, %v553
        %v555 = vpop.f32.mrb[0].mxu0
        %556 = vdwg.mxu0
        %v557 = vadd.f32 %v408, %v554
        %vm558 = vcmask 73728
        %559 = vst.msk [vmem:[#allocation3] sm:$0x1] %vm558, %v557
        %p560 = scmp.eq.s32.totalorder %s28, 1
        // Predicated region
        $region45: #{tpu_custom_call.1} parent=31 // pred_check
          %p561 = pneg %p560
        $region46: #{tpu_custom_call.1} parent=31 // pred_check_branch
          %563 = sbr.rel (%p561) target = $region48
        $region47: #{tpu_custom_call.1} parent=31 // pred_region
          %v564 = vld [vmem:[#allocation2] sm:$0xff]
          %v565 = vld [vmem:[%s2] sm:$0x1]
          %v567 = vlaneseq
          %v568 = vshrl.u32 %v567, 7
          %v569 = vsub.s32 0, %v568
          %v570 = vrot.slane %v565, %v569
          %v572 = vadd.f32 %v564, %v570
          %v573 = vld [vmem:[#allocation3] sm:$0x1]
          %v574 = vlaneseq
          %v575 = vand.u32 %v574, 127
          %v576 = vsel %vm406, %v572, -inf
          %577 = vmax.xlane.f32.xlu0 %v576
          %v578 = vpop.xlane.xlu0 %577
          %vm579 = vcmp.eq.f32.partialorder %v572, %v578
          %v580 = vsel %vm579, %v575, 10
          %v581 = vsel %vm406, %v580, 2147483647
          %v582 = vand.u32 %v581, 65535
          %v583 = vshra.s32 %v581, 16
          %v584 = vcvt.s32.f32 %v582
          %v585 = vcvt.s32.f32 %v583
          %586 = vmin.xlane.f32.xlu0 %v585
          %v587 = vpop.xlane.xlu0 %586
          %vm588 = vcmp.eq.f32.partialorder %v585, %v587
          %v589 = vsel %vm588, %v584, inf
          %590 = vmin.xlane.f32.xlu0 %v589
          %v591 = vpop.xlane.xlu0 %590
          %v592 = vcvt.f32.s32 %v591
          %v593 = vcvt.f32.s32 %v587
          %v594 = vshll.u32 %v593, 16
          %v595 = vadd.s32 %v594, %v592
          %vm596 = vcmp.eq.s32.totalorder %v575, %v595
          %v598 = vlaneseq
          %v599 = vshrl.u32 %v598, 7
          %v600 = vsub.s32 0, %v599
          %v601 = vrot.slane %v573, %v600
          %v603 = vsel %vm596, %v601, 0.0
          %v604 = vsel %vm406, %v603, 0.0
          %605 = vadd.xlane.f32.xlu0 %v604
          %v606 = vpop.xlane.xlu0 %605
          %v607 = vrot.slane %v606, 4
          %v608 = vadd.f32 %v606, %v607
          %v609 = vrot.slane %v608, 2
          %v610 = vadd.f32 %v608, %v609
          %v611 = vrot.slane %v610, 1
          %v612 = vadd.f32 %v610, %v611
          %vm613 = vcmp.eq.s32.totalorder %v575, 0
          %v614 = vsel %vm613, %v612, 0.0
          %v615 = vadd.f32 %v614, 0.0
          %v616 = vsel %vm596, -inf, %v572
          %v617 = vsel %vm406, %v616, -inf
          %618 = vmax.xlane.f32.xlu0 %v617
          %v619 = vpop.xlane.xlu0 %618
          %vm620 = vcmp.eq.f32.partialorder %v616, %v619
          %v621 = vsel %vm620, %v575, 10
          %v622 = vsel %vm406, %v621, 2147483647
          %v623 = vand.u32 %v622, 65535
          %v624 = vshra.s32 %v622, 16
          %v625 = vcvt.s32.f32 %v623
          %v626 = vcvt.s32.f32 %v624
          %627 = vmin.xlane.f32.xlu0 %v626
          %v628 = vpop.xlane.xlu0 %627
          %vm629 = vcmp.eq.f32.partialorder %v626, %v628
          %v630 = vsel %vm629, %v625, inf
          %631 = vmin.xlane.f32.xlu0 %v630
          %v632 = vpop.xlane.xlu0 %631
          %v633 = vcvt.f32.s32 %v632
          %v634 = vcvt.f32.s32 %v628
          %v635 = vshll.u32 %v634, 16
          %v636 = vadd.s32 %v635, %v633
          %vm637 = vcmp.eq.s32.totalorder %v575, %v636
          %v638 = vsel %vm637, %v601, 0.0
          %v639 = vsel %vm406, %v638, 0.0
          %640 = vadd.xlane.f32.xlu0 %v639
          %v641 = vpop.xlane.xlu0 %640
          %v642 = vrot.slane %v641, 4
          %v643 = vadd.f32 %v641, %v642
          %v644 = vrot.slane %v643, 2
          %v645 = vadd.f32 %v643, %v644
          %v646 = vrot.slane %v645, 1
          %v647 = vadd.f32 %v645, %v646
          %vm648 = vcmp.eq.s32.totalorder %v575, 1
          %v649 = vsel %vm648, %v647, 0.0
          %v650 = vadd.f32 %v615, %v649
          %vm651 = vcmask 8192
          %652 = vst.msk [vmem:[%s241] sm:$0x1] %vm651, %v650
        $region48: #{tpu_custom_call.1} parent=31 // pred_fallthru
          _
        %s653 = sand.u32 %s118, 1
        %s654 = scalar_lea.sflag [#allocation6], %s653
        %s655 = sand.u32 %s118, 1
        %s656 = scalar_lea.vmem [#allocation9], %s655
        // Predicated region
        $region49: #{tpu_custom_call.1} parent=31 // pred_check
          %p657 = pneg %p128
        $region50: #{tpu_custom_call.1} parent=31 // pred_check_branch
          %659 = sbr.rel (%p657) target = $region52
        $region51: #{tpu_custom_call.1} parent=31 // pred_region
          %s661 = ssub.s32 16, 16
          %662 = vsyncadd %s654, %s661
          %s663 = smul.addr %s27, 16
          %s664 = scalar_lea.hbm %s3, %s663
          %s666 = sshll.u32 %s656, 4
          %s667 = int_to_ptr.vmem [resolvable:$true] %s666
          %669 = dma.vmem_to_hbm [thread:$0]  %s667, 16, %s664, %s654
        $region52: #{tpu_custom_call.1} parent=31 // pred_fallthru
          _
      $region32: #{tpu_custom_call.1} parent=5 // pred_fallthru
        _
      %p670 = scmp.le.s32.totalorder 2, %s18
      // Predicated region
      $region53: #{tpu_custom_call.1} parent=5 // pred_check
        %p671 = pneg %p670
      $region54: #{tpu_custom_call.1} parent=5 // pred_check_branch
        %673 = sbr.rel (%p671) target = $region56
      $region55: #{tpu_custom_call.1} parent=5 // pred_region
        %s674 = ssub.s32 %s18, 2
        // Predicated region
        $region57: #{tpu_custom_call.1} parent=55 // pred_check
          %p675 = pneg %p134
        $region58: #{tpu_custom_call.1} parent=55 // pred_check_branch
          %677 = sbr.rel (%p675) target = $region60
        $region59: #{tpu_custom_call.1} parent=55 // pred_region
          %s678 = sand.u32 %s119, 1
          %s679 = scalar_lea.sflag [#allocation6], %s678
          %s680 = sand.u32 %s119, 1
          %s681 = scalar_lea.vmem [#allocation9], %s680
          %682 = dma.done %s679, 16
        $region60: #{tpu_custom_call.1} parent=55 // pred_fallthru
          _
      $region56: #{tpu_custom_call.1} parent=5 // pred_fallthru
        _
    $region6: #{tpu_custom_call.1} parent=1 // loop_footer
      %s22 = sadd.s32 1, %s18
    $region7: #{tpu_custom_call.1} parent=1 // loop_footer_branch
      %17 = sbr.rel target = $region3
    $region8: #{tpu_custom_call.1} parent=1 // loop_exit
      _
    %683 = vsyncpa [#allocation5], 1
    %s684 = scalar_lea.sflag [#allocation5], 1
    %685 = vsyncpa %s684, 1
    %686 = vsyncpa [#allocation8], 1
    %s687 = scalar_lea.sflag [#allocation8], 1
    %688 = vsyncpa %s687, 1
    %689 = vsyncpa [#allocation6], 1
    %s690 = scalar_lea.sflag [#allocation6], 1
    %691 = vsyncpa %s690, 1

</llo_original>
